<compile_context>
chip_gen: v7x
topology: tpu7x:2x2x1
jax: 0.10.0
libtpu: 0.0.40
codegen_flags: <defaults>
</compile_context>

<pallas_src>
import jax
import jax.numpy as jnp
from jax.experimental import pallas as pl
from jax.experimental.pallas import tpu as pltpu

LANES = 128
SUBLANES = 8


def _choose_tile_rows(rows, itemsize, target_bytes=1 << 20):
    """Largest tile height (rows per block) that divides `rows`, keeps the
    block at ~`target_bytes`, and respects sublane packing for the dtype."""
    target = max(SUBLANES, target_bytes // (LANES * itemsize))
    if rows <= target:
        return rows
    sub = SUBLANES if itemsize >= 4 else (16 if itemsize == 2 else 32)
    best_any, best_aligned = 1, 0
    i = 1
    while i * i <= rows:
        if rows % i == 0:
            for d in (i, rows // i):
                if d <= target:
                    if d > best_any:
                        best_any = d
                    if d % sub == 0 and d > best_aligned:
                        best_aligned = d
        i += 1
    return best_aligned if best_aligned else best_any


def _make_kernel(n_elems, tm):
    vreg_fold = (tm % SUBLANES == 0)
    inv_n = 1.0 / float(n_elems)  # exact-ish in Python float, rounded once

    def kernel(a_ref, b_ref, out_ref, sum_ref, max_ref, min_ref):
        i = pl.program_id(0)

        # Init accumulators on the first grid step.
        @pl.when(i == 0)
        def _():
            sum_ref[...] = jnp.zeros_like(sum_ref)
            max_ref[...] = jnp.full_like(max_ref, -jnp.inf)
            min_ref[...] = jnp.full_like(min_ref, jnp.inf)

        a = a_ref[...].astype(jnp.float32)
        b = b_ref[...].astype(jnp.float32)
        d = a - b
        d2 = d * d

        if vreg_fold:
            # Fold (tm,128) -> (8,128) with pure elementwise VPU ops; keeps
            # the expensive XLU reduction out of the per-step path.
            d2_f = jnp.sum(d2.reshape(tm // SUBLANES, SUBLANES, LANES), axis=0)
            a_r = a.reshape(tm // SUBLANES, SUBLANES, LANES)
            a_mx = jnp.max(a_r, axis=0)
            a_mn = jnp.min(a_r, axis=0)
            sum_ref[...] += d2_f
            max_ref[...] = jnp.maximum(max_ref[...], a_mx)
            min_ref[...] = jnp.minimum(min_ref[...], a_mn)
        else:
            # Rare fallback when rows is not a multiple of 8 (tm == rows).
            sum_ref[0:1, :] += jnp.sum(d2, axis=0, keepdims=True)
            max_ref[0:1, :] = jnp.maximum(
                max_ref[0:1, :], jnp.max(a, axis=0, keepdims=True))
            min_ref[0:1, :] = jnp.minimum(
                min_ref[0:1, :], jnp.min(a, axis=0, keepdims=True))

        # Finalize on the last step: one full cross-lane reduction, then
        # normalized_mse = (sum / N) / (max - min)^2.
        @pl.when(i == pl.num_programs(0) - 1)
        def _():
            total = jnp.sum(sum_ref[...])
            mx = jnp.max(max_ref[...])
            mn = jnp.min(min_ref[...])
            mse = total * jnp.float32(inv_n)
            rng = mx - mn
            # Note: if A is constant, rng == 0 -> inf/nan (matches reference).
            out_ref[...] = (mse / (rng * rng)).reshape(1, 1)

    return kernel


def normalized_mse_loss(A, B):
    """Normalized MSE loss. A, B: same-shape arrays (e.g. NCHW)."""
    if A.shape != B.shape:
        raise ValueError("Input tensors must have the same shape")
    total = 1
    for s in A.shape:
        total *= s
    if total % LANES != 0:
        raise ValueError(
            "total element count must be a multiple of 128 for this kernel")
    rows = total // LANES
    itemsize = jnp.dtype(A.dtype).itemsize
    tm = _choose_tile_rows(rows, itemsize)

    a2 = A.reshape(rows, LANES)
    b2 = B.reshape(rows, LANES)
    grid = (rows // tm,)

    kernel = _make_kernel(total, tm)

    bytes_accessed = total * (itemsize + jnp.dtype(B.dtype).itemsize) + 4

    out = pl.pallas_call(
        kernel,
        out_shape=jax.ShapeDtypeStruct((1, 1), jnp.float32),
        grid_spec=pltpu.PrefetchScalarGridSpec(
            num_scalar_prefetch=0,
            grid=grid,
            in_specs=[
                pl.BlockSpec((tm, LANES), lambda i: (i, 0)),
                pl.BlockSpec((tm, LANES), lambda i: (i, 0)),
            ],
            out_specs=pl.BlockSpec((1, 1), lambda i: (0, 0)),
            scratch_shapes=[
                pltpu.VMEM((SUBLANES, LANES), jnp.float32),  # sum of sq diffs
                pltpu.VMEM((SUBLANES, LANES), jnp.float32),  # running max(A)
                pltpu.VMEM((SUBLANES, LANES), jnp.float32),  # running min(A)
            ],
        ),
        compiler_params=pltpu.CompilerParams(
            dimension_semantics=("arbitrary",),
        ),
        cost_estimate=pl.CostEstimate(
            flops=3 * total, transcendentals=0, bytes_accessed=bytes_accessed),
    )(a2, b2)
    return out[0, 0]


def _ref(A, B):
    mse = jnp.mean((A.astype(jnp.float32) - B.astype(jnp.float32)) ** 2)
    rng = jnp.max(A).astype(jnp.float32) - jnp.min(A).astype(jnp.float32)
    return mse / (rng * rng)


if __name__ == "__main__":
    key = jax.random.PRNGKey(0)
    ka, kb, kc, kd = jax.random.split(key, 4)

    # Small NCHW inputs: batch=2, channels=4, spatial=16 -> rows=16, grid=(1,)
    A = jax.random.normal(ka, (2, 4, 16, 16), dtype=jnp.float32)
    B = jax.random.normal(kb, (2, 4, 16, 16), dtype=jnp.float32)
    res = jax.block_until_ready(normalized_mse_loss(A, B))
    assert jnp.allclose(res, _ref(A, B), rtol=1e-5, atol=1e-6), (res, _ref(A, B))

    # Larger case to exercise multi-step grid + vreg accumulators (rows=4096,
    # tm=2048, grid=(2,)).
    A2 = jax.random.normal(kc, (4, 8, 128, 128), dtype=jnp.float32)
    B2 = jax.random.normal(kd, (4, 8, 128, 128), dtype=jnp.float32)
    res2 = jax.block_until_ready(normalized_mse_loss(A2, B2))
    assert jnp.allclose(res2, _ref(A2, B2), rtol=1e-5, atol=1e-6), (res2, _ref(A2, B2))

    print("KERNEL_OK")
</pallas_src>

<mosaic_0001>
module attributes {stable_mosaic.version = 11 : i64} {
  func.func @kernel(%arg0: i32, %arg1: memref<16x128xf32, #tpu.memory_space<vmem>>, %arg2: memref<16x128xf32, #tpu.memory_space<vmem>>, %arg3: memref<1x1xf32, #tpu.memory_space<vmem>>, %arg4: memref<8x128xf32, #tpu.memory_space<vmem>>, %arg5: memref<8x128xf32, #tpu.memory_space<vmem>>, %arg6: memref<8x128xf32, #tpu.memory_space<vmem>>) attributes {dimension_semantics = [#tpu.dimension_semantics<arbitrary>], iteration_bounds = array<i64: 1>, scalar_prefetch = 0 : i64, scratch_operands = 3 : i64, tpu.core_type = #tpu.core_type<tc>, window_params = [{transform_indices = @transform_0, window_bounds = array<i64: 16, 128>}, {transform_indices = @transform_1, window_bounds = array<i64: 16, 128>}, {pipeline_mode = #tpu.pipeline_mode<synchronous>, transform_indices = @transform_2, window_bounds = array<i64: 1, 1>}]} {
    %c0_i32 = arith.constant 0 : i32
    %0 = arith.cmpi eq, %arg0, %c0_i32 : i32
    %1 = arith.extui %0 : i1 to i32
    %c0_i32_0 = arith.constant 0 : i32
    %2 = arith.cmpi ne, %1, %c0_i32_0 : i32
    scf.if %2 {
      %cst_20 = arith.constant 0.000000e+00 : f32
      %24 = vector.broadcast %cst_20 : f32 to vector<8x128xf32>
      %c0_21 = arith.constant 0 : index
      %c0_22 = arith.constant 0 : index
      %25 = vector.load %arg4[%c0_21, %c0_22] : memref<8x128xf32, #tpu.memory_space<vmem>>, vector<8x128xf32>
      tpu.vector_store %arg4[%c0_21, %c0_22], %24 {strides = array<i32>} : memref<8x128xf32, #tpu.memory_space<vmem>>, vector<8x128xf32>,
      %cst_23 = arith.constant 0xFF800000 : f32
      %26 = vector.broadcast %cst_23 : f32 to vector<8x128xf32>
      %c0_24 = arith.constant 0 : index
      %c0_25 = arith.constant 0 : index
      %27 = vector.load %arg5[%c0_24, %c0_25] : memref<8x128xf32, #tpu.memory_space<vmem>>, vector<8x128xf32>
      tpu.vector_store %arg5[%c0_24, %c0_25], %26 {strides = array<i32>} : memref<8x128xf32, #tpu.memory_space<vmem>>, vector<8x128xf32>,
      %cst_26 = arith.constant 0x7F800000 : f32
      %28 = vector.broadcast %cst_26 : f32 to vector<8x128xf32>
      %c0_27 = arith.constant 0 : index
      %c0_28 = arith.constant 0 : index
      %29 = vector.load %arg6[%c0_27, %c0_28] : memref<8x128xf32, #tpu.memory_space<vmem>>, vector<8x128xf32>
      tpu.vector_store %arg6[%c0_27, %c0_28], %28 {strides = array<i32>} : memref<8x128xf32, #tpu.memory_space<vmem>>, vector<8x128xf32>,
    } else {
    }
    %c0 = arith.constant 0 : index
    %c0_1 = arith.constant 0 : index
    %3 = vector.load %arg1[%c0, %c0_1] : memref<16x128xf32, #tpu.memory_space<vmem>>, vector<16x128xf32>
    %c0_2 = arith.constant 0 : index
    %c0_3 = arith.constant 0 : index
    %4 = vector.load %arg2[%c0_2, %c0_3] : memref<16x128xf32, #tpu.memory_space<vmem>>, vector<16x128xf32>
    %5 = arith.subf %3, %4 : vector<16x128xf32>
    %6 = arith.mulf %5, %5 : vector<16x128xf32>
    %7 = vector.shape_cast %6 : vector<16x128xf32> to vector<2x8x128xf32>
    %cst = arith.constant dense<0.000000e+00> : vector<8x128xf32>
    %8 = vector.multi_reduction <add>, %7, %cst [0] : vector<2x8x128xf32> to vector<8x128xf32>
    %9 = vector.shape_cast %3 : vector<16x128xf32> to vector<2x8x128xf32>
    %cst_4 = arith.constant dense<0xFF800000> : vector<8x128xf32>
    %10 = vector.multi_reduction <maximumf>, %9, %cst_4 [0] : vector<2x8x128xf32> to vector<8x128xf32>
    %cst_5 = arith.constant dense<0x7F800000> : vector<8x128xf32>
    %11 = vector.multi_reduction <minimumf>, %9, %cst_5 [0] : vector<2x8x128xf32> to vector<8x128xf32>
    %c0_6 = arith.constant 0 : index
    %c0_7 = arith.constant 0 : index
    %12 = vector.load %arg4[%c0_6, %c0_7] : memref<8x128xf32, #tpu.memory_space<vmem>>, vector<8x128xf32>
    %13 = arith.addf %12, %8 : vector<8x128xf32>
    %c0_8 = arith.constant 0 : index
    %c0_9 = arith.constant 0 : index
    %14 = vector.load %arg4[%c0_8, %c0_9] : memref<8x128xf32, #tpu.memory_space<vmem>>, vector<8x128xf32>
    tpu.vector_store %arg4[%c0_8, %c0_9], %13 {strides = array<i32>} : memref<8x128xf32, #tpu.memory_space<vmem>>, vector<8x128xf32>,
    %c0_10 = arith.constant 0 : index
    %c0_11 = arith.constant 0 : index
    %15 = vector.load %arg5[%c0_10, %c0_11] : memref<8x128xf32, #tpu.memory_space<vmem>>, vector<8x128xf32>
    %16 = arith.maximumf %15, %10 : vector<8x128xf32>
    %c0_12 = arith.constant 0 : index
    %c0_13 = arith.constant 0 : index
    %17 = vector.load %arg5[%c0_12, %c0_13] : memref<8x128xf32, #tpu.memory_space<vmem>>, vector<8x128xf32>
    tpu.vector_store %arg5[%c0_12, %c0_13], %16 {strides = array<i32>} : memref<8x128xf32, #tpu.memory_space<vmem>>, vector<8x128xf32>,
    %c0_14 = arith.constant 0 : index
    %c0_15 = arith.constant 0 : index
    %18 = vector.load %arg6[%c0_14, %c0_15] : memref<8x128xf32, #tpu.memory_space<vmem>>, vector<8x128xf32>
    %19 = arith.minimumf %18, %11 : vector<8x128xf32>
    %c0_16 = arith.constant 0 : index
    %c0_17 = arith.constant 0 : index
    %20 = vector.load %arg6[%c0_16, %c0_17] : memref<8x128xf32, #tpu.memory_space<vmem>>, vector<8x128xf32>
    tpu.vector_store %arg6[%c0_16, %c0_17], %19 {strides = array<i32>} : memref<8x128xf32, #tpu.memory_space<vmem>>, vector<8x128xf32>,
    %c0_i32_18 = arith.constant 0 : i32
    %21 = arith.cmpi eq, %arg0, %c0_i32_18 : i32
    %22 = arith.extui %21 : i1 to i32
    %c0_i32_19 = arith.constant 0 : i32
    %23 = arith.cmpi ne, %22, %c0_i32_19 : i32
    scf.if %23 {
      %c0_20 = arith.constant 0 : index
      %c0_21 = arith.constant 0 : index
      %24 = vector.load %arg4[%c0_20, %c0_21] : memref<8x128xf32, #tpu.memory_space<vmem>>, vector<8x128xf32>
      %25 = vector.shape_cast %24 : vector<8x128xf32> to vector<1x8x128xf32>
      %cst_22 = arith.constant dense<0.000000e+00> : vector<1xf32>
      %26 = vector.multi_reduction <add>, %25, %cst_22 [1, 2] : vector<1x8x128xf32> to vector<1xf32>
      %27 = vector.shape_cast %26 : vector<1xf32> to vector<1x1x1xf32>
      %28 = vector.extract %27[0, 0, 0] : f32 from vector<1x1x1xf32>
      %c0_23 = arith.constant 0 : index
      %c0_24 = arith.constant 0 : index
      %29 = vector.load %arg5[%c0_23, %c0_24] : memref<8x128xf32, #tpu.memory_space<vmem>>, vector<8x128xf32>
      %30 = vector.shape_cast %29 : vector<8x128xf32> to vector<1x8x128xf32>
      %cst_25 = arith.constant dense<0xFF800000> : vector<1xf32>
      %31 = vector.multi_reduction <maximumf>, %30, %cst_25 [1, 2] : vector<1x8x128xf32> to vector<1xf32>
      %32 = vector.shape_cast %31 : vector<1xf32> to vector<1x1x1xf32>
      %33 = vector.extract %32[0, 0, 0] : f32 from vector<1x1x1xf32>
      %c0_26 = arith.constant 0 : index
      %c0_27 = arith.constant 0 : index
      %34 = vector.load %arg6[%c0_26, %c0_27] : memref<8x128xf32, #tpu.memory_space<vmem>>, vector<8x128xf32>
      %35 = vector.shape_cast %34 : vector<8x128xf32> to vector<1x8x128xf32>
      %cst_28 = arith.constant dense<0x7F800000> : vector<1xf32>
      %36 = vector.multi_reduction <minimumf>, %35, %cst_28 [1, 2] : vector<1x8x128xf32> to vector<1xf32>
      %37 = vector.shape_cast %36 : vector<1xf32> to vector<1x1x1xf32>
      %38 = vector.extract %37[0, 0, 0] : f32 from vector<1x1x1xf32>
      %cst_29 = arith.constant 4.8828125E-4 : f32
      %39 = arith.mulf %28, %cst_29 : f32
      %40 = arith.subf %33, %38 : f32
      %41 = arith.mulf %40, %40 : f32
      %42 = arith.divf %39, %41 : f32
      %43 = vector.broadcast %42 : f32 to vector<1x1xf32>
      %c0_30 = arith.constant 0 : index
      %c0_31 = arith.constant 0 : index
      %44 = vector.load %arg3[%c0_30, %c0_31] : memref<1x1xf32, #tpu.memory_space<vmem>>, vector<1x1xf32>
      tpu.vector_store %arg3[%c0_30, %c0_31], %43 {strides = array<i32>} : memref<1x1xf32, #tpu.memory_space<vmem>>, vector<1x1xf32>,
    } else {
    }
    return
  }
  func.func @transform_0(%arg0: i32) -> (i32, i32) {
    %c0_i32 = arith.constant 0 : i32
    %c0_i32_0 = arith.constant 0 : i32
    return %arg0, %c0_i32 : i32, i32
  }
  func.func @transform_1(%arg0: i32) -> (i32, i32) {
    %c0_i32 = arith.constant 0 : i32
    %c0_i32_0 = arith.constant 0 : i32
    return %arg0, %c0_i32 : i32, i32
  }
  func.func @transform_2(%arg0: i32) -> (i32, i32) {
    %c0_i32 = arith.constant 0 : i32
    %c0_i32_0 = arith.constant 0 : i32
    %c0_i32_1 = arith.constant 0 : i32
    return %c0_i32, %c0_i32_0 : i32, i32
  }
}

</mosaic_0001>

<llo_original>
// kernel: tpu_custom_call.1
$region0: #{tpu_custom_call.1}
  #allocation0 [shape = 'u32[]', space=smem, size = 0x4, offset = 0x4, fixed_abs, tag = 'smem constant byte address 0x4 - core index']
  #allocation1 [shape = 'u32[144,128]{1,0:T(1,128)}', space=vmem, size = 0x12000, scoped, tag = 'internal scratch']
  #allocation2 [shape = 'f32[8,128]{1,0:T(8,128)}', space=vmem, size = 0x1000, scoped, tag = 'scratch operand']
  #allocation3 [shape = 'f32[8,128]{1,0:T(8,128)}', space=vmem, size = 0x1000, scoped, tag = 'scratch operand']
  #allocation4 [shape = 'f32[8,128]{1,0:T(8,128)}', space=vmem, size = 0x1000, scoped, tag = 'scratch operand']
  %s0 = inlined_call_operand.hbm [shape: f32[16,128], index: 0, kind: input, shape index: {}]
  %s1 = inlined_call_operand.hbm [shape: f32[16,128], index: 1, kind: input, shape index: {}]
  %s2 = inlined_call_operand.hbm [shape: f32[1,1], index: 2, kind: output, shape index: {}]
  %s3 = sld [smem:[#allocation0]]
  $region34: #{tpu_custom_call.1} parent=0
    _
  %s5 = ssub.s32 1, %s3
  %s6 = scalar_select 0, %s5, %s3
  $region1: #{tpu_custom_call.1} parent=0
    #allocation5 [shape = 'u8[8192]{0}', space=vmem, size = 0x2000, scoped, tag = 'input window, operand 0, single buffered']
    #allocation6 [shape = 's32[1]{0}', space=sflag, size = 0x4, scoped, tag = 'scoped memory for tpu_custom_call.1']
    #allocation7 [shape = 's32[1]{0}', space=sflag, size = 0x4, scoped, tag = 'scoped memory for tpu_custom_call.1']
    #allocation8 [shape = 'u8[8192]{0}', space=vmem, size = 0x2000, scoped, tag = 'input window, operand 1, single buffered']
    #allocation9 [shape = 's32[1]{0}', space=sflag, size = 0x4, scoped, tag = 'scoped memory for tpu_custom_call.1']
    #allocation10 [shape = 'u8[512]{0}', space=vmem, size = 0x400, scoped, tag = 'output window, operand 0, single buffered']
    %7 = vsyncpa [#allocation6], 0
    %8 = vsyncpa [#allocation9], 0
    %9 = vsyncpa [#allocation7], 0
    // Predicated region
    $region2: #{tpu_custom_call.1} parent=1 // pred_check
      _
    $region3: #{tpu_custom_call.1} parent=1 // pred_check_branch
      %11 = sbr.rel (0) target = $region5
    $region4: #{tpu_custom_call.1} parent=1 // pred_region
      %s13 = ssub.s32 256, 256
      %14 = vsyncadd [#allocation6], %s13
      %s15 = sshll.u32 [#allocation5], 4
      %s16 = int_to_ptr.vmem [resolvable:$true] %s15
      %21 = dma.hbm_to_vmem [thread:$0]  %s0, 256, %s16, [#allocation6], 128, 128, 8
    $region5: #{tpu_custom_call.1} parent=1 // pred_fallthru
      _
    // Predicated region
    $region6: #{tpu_custom_call.1} parent=1 // pred_check
      _
    $region7: #{tpu_custom_call.1} parent=1 // pred_check_branch
      %23 = sbr.rel (0) target = $region9
    $region8: #{tpu_custom_call.1} parent=1 // pred_region
      %s25 = ssub.s32 256, 256
      %26 = vsyncadd [#allocation9], %s25
      %s27 = sshll.u32 [#allocation8], 4
      %s28 = int_to_ptr.vmem [resolvable:$true] %s27
      %33 = dma.hbm_to_vmem [thread:$0]  %s1, 256, %s28, [#allocation9], 128, 128, 8
    $region9: #{tpu_custom_call.1} parent=1 // pred_fallthru
      _
    // Predicated region
    $region10: #{tpu_custom_call.1} parent=1 // pred_check
      _
    $region11: #{tpu_custom_call.1} parent=1 // pred_check_branch
      %35 = sbr.rel (0) target = $region13
    $region12: #{tpu_custom_call.1} parent=1 // pred_region
      %36 = dma.done [#allocation6], 256
    $region13: #{tpu_custom_call.1} parent=1 // pred_fallthru
      _
    // Predicated region
    $region14: #{tpu_custom_call.1} parent=1 // pred_check
      _
    $region15: #{tpu_custom_call.1} parent=1 // pred_check_branch
      %38 = sbr.rel (0) target = $region17
    $region16: #{tpu_custom_call.1} parent=1 // pred_region
      %39 = dma.done [#allocation9], 256
    $region17: #{tpu_custom_call.1} parent=1 // pred_fallthru
      _
    %p40 = scmp.eq.s32.totalorder 0, 0
    // Predicated region
    $region18: #{tpu_custom_call.1} parent=1 // pred_check
      %p41 = pneg %p40
    $region19: #{tpu_custom_call.1} parent=1 // pred_check_branch
      %43 = sbr.rel (%p41) target = $region21
    $region20: #{tpu_custom_call.1} parent=1 // pred_region
      %44 = vst [vmem:[#allocation2] sm:$0xff] 0.0
      %45 = vst [vmem:[#allocation3] sm:$0xff] -inf
      %46 = vst [vmem:[#allocation4] sm:$0xff] inf
    $region21: #{tpu_custom_call.1} parent=1 // pred_fallthru
      _
    %v47 = vld [vmem:[#allocation5] sm:$0xff]
    %v48 = vld [vmem:[#allocation5 + $0x8] sm:$0xff]
    %v49 = vld [vmem:[#allocation8] sm:$0xff]
    %v50 = vld [vmem:[#allocation8 + $0x8] sm:$0xff]
    %v51 = vsub.f32 %v47, %v49
    %v52 = vsub.f32 %v48, %v50
    %v53 = vmul.f32 %v51, %v51
    %v54 = vmul.f32 %v52, %v52
    %v55 = vadd.f32 %v53, %v54
    %v56 = vmax.f32 %v47, %v48
    %v57 = vmin.f32 %v47, %v48
    %v58 = vld [vmem:[#allocation2] sm:$0xff]
    %v59 = vadd.f32 %v58, %v55
    %60 = vst [vmem:[#allocation2] sm:$0xff] %v59
    %v61 = vld [vmem:[#allocation3] sm:$0xff]
    %v62 = vmax.f32 %v61, %v56
    %63 = vst [vmem:[#allocation3] sm:$0xff] %v62
    %v64 = vld [vmem:[#allocation4] sm:$0xff]
    %v65 = vmin.f32 %v64, %v57
    %66 = vst [vmem:[#allocation4] sm:$0xff] %v65
    // Predicated region
    $region22: #{tpu_custom_call.1} parent=1 // pred_check
      %p67 = pneg %p40
    $region23: #{tpu_custom_call.1} parent=1 // pred_check_branch
      %69 = sbr.rel (%p67) target = $region25
    $region24: #{tpu_custom_call.1} parent=1 // pred_region
      %v70 = vld [vmem:[#allocation2] sm:$0xff]
      %71 = vadd.xlane.f32.xlu0 %v70
      %v72 = vpop.xlane.xlu0 %71
      %v73 = vrot.slane %v72, 4
      %v74 = vadd.f32 %v72, %v73
      %v75 = vrot.slane %v74, 2
      %v76 = vadd.f32 %v74, %v75
      %v77 = vrot.slane %v76, 1
      %v78 = vadd.f32 %v76, %v77
      %s79 = vtos %v78
      %v80 = vld [vmem:[#allocation3] sm:$0xff]
      %81 = vmax.xlane.f32.xlu0 %v80
      %v82 = vpop.xlane.xlu0 %81
      %v83 = vrot.slane %v82, 4
      %v84 = vmax.f32 %v82, %v83
      %v85 = vrot.slane %v84, 2
      %v86 = vmax.f32 %v84, %v85
      %v87 = vrot.slane %v86, 1
      %v88 = vmax.f32 %v86, %v87
      %s89 = vtos %v88
      %v90 = vld [vmem:[#allocation4] sm:$0xff]
      %91 = vmin.xlane.f32.xlu0 %v90
      %v92 = vpop.xlane.xlu0 %91
      %v93 = vrot.slane %v92, 4
      %v94 = vmin.f32 %v92, %v93
      %v95 = vrot.slane %v94, 2
      %v96 = vmin.f32 %v94, %v95
      %v97 = vrot.slane %v96, 1
      %v98 = vmin.f32 %v96, %v97
      %s99 = vtos %v98
      %s100 = smul.f32 %s79, 0.00048828125
      %s101 = ssub.f32 %s89, %s99
      %s102 = smul.f32 %s101, %s101
      %v103 = vstv %s102
      %v104 = vrcp.pop %v103
      %s105 = vtos %v104
      %s106 = smul.f32 %s100, %s105
      %v107 = vstv %s106
      %vm108 = vcmask 0
      %109 = vst.msk [vmem:[#allocation10] sm:$0x1] %vm108, %v107
    $region25: #{tpu_custom_call.1} parent=1 // pred_fallthru
      _
    // Predicated region
    $region26: #{tpu_custom_call.1} parent=1 // pred_check
      _
    $region27: #{tpu_custom_call.1} parent=1 // pred_check_branch
      %111 = sbr.rel (0) target = $region29
    $region28: #{tpu_custom_call.1} parent=1 // pred_region
      %s113 = ssub.s32 16, 16
      %114 = vsyncadd [#allocation7], %s113
      %s116 = sshll.u32 [#allocation10], 4
      %s117 = int_to_ptr.vmem [resolvable:$true] %s116
      %119 = dma.vmem_to_hbm [thread:$0]  %s117, 16, %s2, [#allocation7]
    $region29: #{tpu_custom_call.1} parent=1 // pred_fallthru
      _
    // Predicated region
    $region30: #{tpu_custom_call.1} parent=1 // pred_check
      _
    $region31: #{tpu_custom_call.1} parent=1 // pred_check_branch
      %121 = sbr.rel (0) target = $region33
    $region32: #{tpu_custom_call.1} parent=1 // pred_region
      %122 = dma.done [#allocation7], 16
    $region33: #{tpu_custom_call.1} parent=1 // pred_fallthru
      _
    %123 = vsyncpa [#allocation6], 1
    %124 = vsyncpa [#allocation9], 1
    %125 = vsyncpa [#allocation7], 1

</llo_original>
